<compile_context>
chip_gen: v7x
topology: tpu7x:2x2x1
jax: 0.10.0
libtpu: 0.0.40
codegen_flags: <defaults>
</compile_context>

<pallas_src>
import jax
import jax.numpy as jnp
from jax import lax
from jax.experimental import pallas as pl
from jax.experimental.pallas import tpu as pltpu


def _focus_kernel(x_ref, b_ref, bias_ref, o_ref):
    """One grid step = one (batch, output-row-tile) block.

    x_ref   : (1, Ho_t, 2*W*C1)  row-pair slabs, lane j = dy*W*C1 + w*C1 + c
    b_ref   : (2*W*C1, Wo*C2)    structured weight (space-to-depth + 1x1 conv + BN scale)
    bias_ref: (1, Wo*C2)         folded BN bias, tiled over Wo
    o_ref   : (1, Ho_t, Wo*C2)   lane-dense output, lane = wo*C2 + co
    """
    y = jnp.dot(x_ref[0], b_ref[...], preferred_element_type=jnp.float32)
    y = y + bias_ref[0]
    # Hardswish: x * hardtanh(x + 3, 0, 6) / 6
    y = y * jnp.clip(y + 3.0, 0.0, 6.0) * (1.0 / 6.0)
    o_ref[0] = y.astype(o_ref.dtype)


def _pick_row_tile(ho, max_rows=64):
    """Largest multiple-of-8 divisor of `ho` up to max_rows (or ho itself if tiny)."""
    if ho <= 8:
        return ho
    t = min(max_rows, ho)
    t -= t % 8
    while t >= 8:
        if ho % t == 0:
            return t
        t -= 8
    return ho


def focus_forward(x_nchw, w_oihw, gamma, beta, mean, var, eps=1e-5):
    """Pallas implementation of Focus.forward (inference-mode BN)."""
    N, C1, H, W = x_nchw.shape
    C2 = w_oihw.shape[0]
    assert w_oihw.shape == (C2, 4 * C1, 1, 1)
    assert H % 2 == 0 and W % 2 == 0
    Ho, Wo = H // 2, W // 2

    # ---------------- host-side parameter folding (done once) ----------------
    scale = gamma / jnp.sqrt(var + eps)            # (C2,)
    bias = beta - mean * scale                     # (C2,)

    # PyTorch concat channel order: c_cat = (dy + 2*dx)*C1 + c
    w_cat = w_oihw.reshape(C2, 4 * C1).T           # (4*C1, C2), rows in concat order
    w_r = w_cat.reshape(2, 2, C1, C2)              # axes: (dx, dy, c, co)
    w_dydx = jnp.transpose(w_r, (1, 0, 2, 3))      # axes: (dy, dx, c, co)
    w_folded = w_dydx * scale[None, None, None, :]  # fold BN scale into the weights

    # Block-diagonal expansion over Wo: the stride-2 spatial gather of Focus
    # becomes a single dense matmul against lane-dense row-pair slabs.
    eye = jnp.eye(Wo, dtype=w_folded.dtype)
    b_parts = [jnp.kron(eye, w_folded[dy].reshape(2 * C1, C2)) for dy in range(2)]
    B = jnp.concatenate(b_parts, axis=0)           # (2*W*C1, Wo*C2)
    bias_lane = jnp.tile(bias, Wo).reshape(1, Wo * C2)

    # ------------- activation layout: NCHW -> NHWC -> row-pair slabs ---------
    # (transpose at the module boundary; the reshape below is free/contiguous)
    xr = jnp.transpose(x_nchw, (0, 2, 3, 1)).reshape(N, Ho, 2 * W * C1)

    K = 2 * W * C1                                 # contraction depth (128 here)
    L = Wo * C2                                    # lane-dense output width
    Ho_t = _pick_row_tile(Ho)
    grid = (N, Ho // Ho_t)

    cost = pl.CostEstimate(
        flops=2 * N * Ho * K * L,
        transcendentals=0,
        bytes_accessed=4 * (xr.size + B.size + bias_lane.size + N * Ho * L),
    )

    out = pl.pallas_call(
        _focus_kernel,
        out_shape=jax.ShapeDtypeStruct((N, Ho, L), x_nchw.dtype),
        grid=grid,
        in_specs=[
            pl.BlockSpec((1, Ho_t, K), lambda n, h: (n, h, 0)),
            pl.BlockSpec((K, L), lambda n, h: (0, 0)),
            pl.BlockSpec((1, L), lambda n, h: (0, 0)),
        ],
        out_specs=pl.BlockSpec((1, Ho_t, L), lambda n, h: (n, h, 0)),
        compiler_params=pltpu.CompilerParams(
            dimension_semantics=("parallel", "parallel")),
        cost_estimate=cost,
    )(xr, B, bias_lane)

    # (N, Ho, Wo*C2) -> (N, C2, Ho, Wo)
    return jnp.transpose(out.reshape(N, Ho, Wo, C2), (0, 3, 1, 2))


# --------------------------- pure-JAX reference ------------------------------
def _ref_focus(x_nchw, w_oihw, gamma, beta, mean, var, eps=1e-5):
    p = jnp.concatenate(
        [x_nchw[..., ::2, ::2], x_nchw[..., 1::2, ::2],
         x_nchw[..., ::2, 1::2], x_nchw[..., 1::2, 1::2]], axis=1)
    y = lax.conv_general_dilated(
        p, w_oihw, window_strides=(1, 1), padding="VALID",
        dimension_numbers=("NCHW", "OIHW", "NCHW"))
    scale = gamma / jnp.sqrt(var + eps)
    bias = beta - mean * scale
    y = y * scale[None, :, None, None] + bias[None, :, None, None]
    return y * jnp.clip(y + 3.0, 0.0, 6.0) / 6.0


# --------------------------------- main ---------------------------------------
if __name__ == "__main__":
    key = jax.random.PRNGKey(0)
    N, C1, H, W = 2, 4, 16, 16
    C2 = 8
    eps = 1e-5

    ks = jax.random.split(key, 6)
    x = jax.random.normal(ks[0], (N, C1, H, W), jnp.float32)
    # Conv2d(4*C1, C2, k=1, bias=False) weight in PyTorch OIHW layout.
    w = 0.2 * jax.random.normal(ks[1], (C2, 4 * C1, 1, 1), jnp.float32)
    # BatchNorm2d(C2) inference-mode parameters.
    gamma = 1.0 + 0.1 * jax.random.normal(ks[2], (C2,), jnp.float32)
    beta = 0.1 * jax.random.normal(ks[3], (C2,), jnp.float32)
    mean = 0.1 * jax.random.normal(ks[4], (C2,), jnp.float32)
    var = jnp.abs(jax.random.normal(ks[5], (C2,), jnp.float32)) + 0.5

    out = focus_forward(x, w, gamma, beta, mean, var, eps)
    jax.block_until_ready(out)

    ref = _ref_focus(x, w, gamma, beta, mean, var, eps)
    assert out.shape == (N, C2, H // 2, W // 2) and out.dtype == jnp.float32
    err = jnp.max(jnp.abs(out - ref))
    assert jnp.allclose(out, ref, atol=1e-4, rtol=1e-4), f"max abs err = {err}"

    print("KERNEL_OK")
</pallas_src>

<mosaic_0001>
module attributes {stable_mosaic.version = 11 : i64} {
  func.func @_focus_kernel(%arg0: i32, %arg1: i32, %arg2: memref<1x8x128xf32, #tpu.memory_space<vmem>>, %arg3: memref<128x64xf32, #tpu.memory_space<vmem>>, %arg4: memref<1x64xf32, #tpu.memory_space<vmem>>, %arg5: memref<1x8x64xf32, #tpu.memory_space<vmem>>) attributes {dimension_semantics = [#tpu.dimension_semantics<parallel>, #tpu.dimension_semantics<parallel>], iteration_bounds = array<i64: 2, 1>, scalar_prefetch = 0 : i64, scratch_operands = 0 : i64, tpu.core_type = #tpu.core_type<tc>, window_params = [{transform_indices = @transform_0, window_bounds = array<i64: 1, 8, 128>}, {pipeline_mode = #tpu.pipeline_mode<synchronous>, transform_indices = @transform_1, window_bounds = array<i64: 128, 64>}, {pipeline_mode = #tpu.pipeline_mode<synchronous>, transform_indices = @transform_2, window_bounds = array<i64: 1, 64>}, {transform_indices = @transform_3, window_bounds = array<i64: 1, 8, 64>}]} {
    %c0 = arith.constant 0 : index
    %c0_0 = arith.constant 0 : index
    %c0_1 = arith.constant 0 : index
    %0 = vector.load %arg2[%c0, %c0_0, %c0_1] : memref<1x8x128xf32, #tpu.memory_space<vmem>>, vector<1x8x128xf32>
    %1 = vector.shape_cast %0 : vector<1x8x128xf32> to vector<8x128xf32>
    %c0_2 = arith.constant 0 : index
    %c0_3 = arith.constant 0 : index
    %2 = vector.load %arg3[%c0_2, %c0_3] : memref<128x64xf32, #tpu.memory_space<vmem>>, vector<128x64xf32>
    %cst = arith.constant dense<0.000000e+00> : vector<8x64xf32>
    %3 = tpu.matmul %1, %2, %cst {dimension_numbers = #tpu.dot_dimension_numbers<[1], [0], [0], [1], [0, 0, 1, 1], [], []>} : vector<8x128xf32>, vector<128x64xf32>, vector<8x64xf32> -> vector<8x64xf32>
    %c0_4 = arith.constant 0 : index
    %c0_5 = arith.constant 0 : index
    %4 = vector.load %arg4[%c0_4, %c0_5] : memref<1x64xf32, #tpu.memory_space<vmem>>, vector<1x64xf32>
    %5 = vector.shape_cast %4 : vector<1x64xf32> to vector<64xf32>
    %6 = vector.shape_cast %5 : vector<64xf32> to vector<1x64xf32>
    %7 = vector.broadcast %6 : vector<1x64xf32> to vector<8x64xf32>
    %8 = arith.addf %3, %7 : vector<8x64xf32>
    %cst_6 = arith.constant 3.000000e+00 : f32
    %9 = vector.broadcast %cst_6 : f32 to vector<8x64xf32>
    %10 = arith.addf %8, %9 : vector<8x64xf32>
    %cst_7 = arith.constant 0.000000e+00 : f32
    %cst_8 = arith.constant 6.000000e+00 : f32
    %11 = vector.broadcast %cst_7 : f32 to vector<8x64xf32>
    %12 = arith.maximumf %11, %10 : vector<8x64xf32>
    %13 = vector.broadcast %cst_8 : f32 to vector<8x64xf32>
    %14 = arith.minimumf %13, %12 : vector<8x64xf32>
    %15 = arith.mulf %8, %14 : vector<8x64xf32>
    %cst_9 = arith.constant 0.166666672 : f32
    %16 = vector.broadcast %cst_9 : f32 to vector<8x64xf32>
    %17 = arith.mulf %15, %16 : vector<8x64xf32>
    %c0_10 = arith.constant 0 : index
    %c0_11 = arith.constant 0 : index
    %c0_12 = arith.constant 0 : index
    %18 = vector.load %arg5[%c0_10, %c0_11, %c0_12] : memref<1x8x64xf32, #tpu.memory_space<vmem>>, vector<1x8x64xf32>
    %19 = vector.shape_cast %18 : vector<1x8x64xf32> to vector<8x64xf32>
    %20 = vector.shape_cast %17 : vector<8x64xf32> to vector<1x8x64xf32>
    tpu.vector_store %arg5[%c0_10, %c0_11, %c0_12], %20 {strides = array<i32>} : memref<1x8x64xf32, #tpu.memory_space<vmem>>, vector<1x8x64xf32>,
    return
  }
  func.func @transform_0(%arg0: i32, %arg1: i32) -> (i32, i32, i32) {
    %c0_i32 = arith.constant 0 : i32
    %c0_i32_0 = arith.constant 0 : i32
    return %arg0, %arg1, %c0_i32 : i32, i32, i32
  }
  func.func @transform_1(%arg0: i32, %arg1: i32) -> (i32, i32) {
    %c0_i32 = arith.constant 0 : i32
    %c0_i32_0 = arith.constant 0 : i32
    %c0_i32_1 = arith.constant 0 : i32
    return %c0_i32, %c0_i32_0 : i32, i32
  }
  func.func @transform_2(%arg0: i32, %arg1: i32) -> (i32, i32) {
    %c0_i32 = arith.constant 0 : i32
    %c0_i32_0 = arith.constant 0 : i32
    %c0_i32_1 = arith.constant 0 : i32
    return %c0_i32, %c0_i32_0 : i32, i32
  }
  func.func @transform_3(%arg0: i32, %arg1: i32) -> (i32, i32, i32) {
    %c0_i32 = arith.constant 0 : i32
    %c0_i32_0 = arith.constant 0 : i32
    return %arg0, %arg1, %c0_i32 : i32, i32, i32
  }
}

</mosaic_0001>

<llo_original>
// kernel: tpu_custom_call.1
$region0: #{tpu_custom_call.1}
  #allocation0 [shape = 'u32[]', space=smem, size = 0x4, offset = 0x4, fixed_abs, tag = 'smem constant byte address 0x4 - core index']
  #allocation1 [shape = 'u32[144,128]{1,0:T(1,128)}', space=vmem, size = 0x12000, scoped, tag = 'internal scratch']
  %s0 = inlined_call_operand.vmem [shape: f32[2,8,128], index: 0, kind: input, shape index: {}]
  %s1 = inlined_call_operand.vmem [shape: f32[128,64], index: 1, kind: input, shape index: {}]
  %s2 = inlined_call_operand.vmem [shape: f32[1,64], index: 2, kind: input, shape index: {}]
  %s3 = inlined_call_operand.hbm [shape: f32[2,8,64], index: 3, kind: output, shape index: {}]
  %s4 = sld [smem:[#allocation0]]
  $region45: #{tpu_custom_call.1} parent=0
    _
  %s6 = ssub.s32 1, %s4
  %s7 = scalar_select 0, %s6, %s4
  $region1: #{tpu_custom_call.1} parent=0
    #allocation2 [shape = 'u8[8192]{0}', space=vmem, size = 0x2000, scoped, tag = 'output window, operand 0']
    #allocation3 [shape = 's32[2]{0}', space=sflag, size = 0x8, scoped, tag = 'scoped memory for tpu_custom_call.1']
    %8 = vsyncpa [#allocation3], 0
    %s9 = scalar_lea.sflag [#allocation3], 1
    %10 = vsyncpa %s9, 0
    loop: start=0, step=1, limit=4
    $region2: #{tpu_custom_call.1} parent=1 // loop_pre_header
      _
    $region3: #{tpu_custom_call.1} parent=1 // loop_header
      %s12 = sphi 0, %s16
      %p13 = scmp.ge.s32.totalorder %s12, 4
      %s19 = sphi 0, %s31
      %s20 = sphi 0, %s27
      %s21 = sphi 0, %s19
      %s22 = sphi 0, %s20
      %s23 = sphi 0, %s21
      %s24 = sphi 0, %s22
      %s36 = sphi 0, %s38
      %s39 = sphi 0, %s36
      %s40 = sphi 0, %s39
      %s56 = sphi 0, %s40
      %s60 = sphi 0, %s60
      %s62 = sphi 0, %s60
      %s63 = sphi 0, %s62
      %s77 = sphi 0, %s63
      %s81 = sphi 0, %s81
      %s83 = sphi 0, %s81
      %s84 = sphi 0, %s83
      %s98 = sphi 0, %s84
      %s106 = sphi 0, %s108
      %s109 = sphi 0, %s106
      %s110 = sphi 0, %s109
      %s126 = sphi 0, %s110
    $region4: #{tpu_custom_call.1} parent=1 // loop_header_branch
      %15 = sbr.rel (%p13) target = $region8
    $region5: #{tpu_custom_call.1} parent=1 // loop_body
      %s17 = ssub.s32 %s12, 1
      %s18 = ssub.s32 %s12, 2
      %s25 = sadd.s32 1, %s20
      %p26 = scmp.ge.s32.totalorder %s25, 1
      %s27 = scalar_select %p26, 0, %s25
      %s28 = sadd.s32 1, %s19
      %s29 = scalar_select %p26, %s28, %s19
      %p30 = scmp.ge.s32.totalorder %s29, 2
      %s31 = scalar_select %p30, 0, %s29
      %s32 = ssub.s32 %s19, %s31
      %s33 = ssub.s32 %s20, %s27
      %s34 = sor.u32 %s32, %s33
      %p35 = scmp.eq.s32.totalorder %s34, 0
      %s37 = sadd.s32 %s36, 1
      %s38 = scalar_select %p35, %s36, %s37
      %p41 = pneg %p35
      %p42 = scmp.eq.s32.totalorder %s12, 1
      %p43 = por %p41, %p42
      %p44 = scmp.ne.s32.totalorder %s36, %s39
      %p45 = scmp.eq.s32.totalorder %s12, 0
      %p46 = por %p44, %p45
      %p47 = scmp.ne.s32.totalorder %s36, %s39
      %p48 = scmp.eq.s32.totalorder %s17, 1
      %p49 = por %p47, %p48
      %p50 = scmp.ne.s32.totalorder %s39, %s40
      %p51 = scmp.eq.s32.totalorder %s17, 0
      %p52 = por %p50, %p51
      %p53 = scmp.ne.s32.totalorder %s39, %s40
      %p54 = scmp.eq.s32.totalorder %s18, 1
      %p55 = por %p53, %p54
      %p57 = scmp.ne.s32.totalorder %s40, %s56
      %p58 = scmp.eq.s32.totalorder %s18, 0
      %p59 = por %p57, %p58
      %s61 = sadd.s32 %s60, 1
      %p64 = scmp.eq.s32.totalorder %s12, 1
      %p65 = scmp.ne.s32.totalorder %s60, %s62
      %p66 = scmp.eq.s32.totalorder %s12, 0
      %p67 = por %p65, %p66
      %p68 = scmp.ne.s32.totalorder %s60, %s62
      %p69 = scmp.eq.s32.totalorder %s17, 1
      %p70 = por %p68, %p69
      %p71 = scmp.ne.s32.totalorder %s62, %s63
      %p72 = scmp.eq.s32.totalorder %s17, 0
      %p73 = por %p71, %p72
      %p74 = scmp.ne.s32.totalorder %s62, %s63
      %p75 = scmp.eq.s32.totalorder %s18, 1
      %p76 = por %p74, %p75
      %p78 = scmp.ne.s32.totalorder %s63, %s77
      %p79 = scmp.eq.s32.totalorder %s18, 0
      %p80 = por %p78, %p79
      %s82 = sadd.s32 %s81, 1
      %p85 = scmp.eq.s32.totalorder %s12, 1
      %p86 = scmp.ne.s32.totalorder %s81, %s83
      %p87 = scmp.eq.s32.totalorder %s12, 0
      %p88 = por %p86, %p87
      %p89 = scmp.ne.s32.totalorder %s81, %s83
      %p90 = scmp.eq.s32.totalorder %s17, 1
      %p91 = por %p89, %p90
      %p92 = scmp.ne.s32.totalorder %s83, %s84
      %p93 = scmp.eq.s32.totalorder %s17, 0
      %p94 = por %p92, %p93
      %p95 = scmp.ne.s32.totalorder %s83, %s84
      %p96 = scmp.eq.s32.totalorder %s18, 1
      %p97 = por %p95, %p96
      %p99 = scmp.ne.s32.totalorder %s84, %s98
      %p100 = scmp.eq.s32.totalorder %s18, 0
      %p101 = por %p99, %p100
      %s102 = ssub.s32 %s19, %s31
      %s103 = ssub.s32 %s20, %s27
      %s104 = sor.u32 %s102, %s103
      %p105 = scmp.eq.s32.totalorder %s104, 0
      %s107 = sadd.s32 %s106, 1
      %s108 = scalar_select %p105, %s106, %s107
      %p111 = pneg %p105
      %p112 = scmp.eq.s32.totalorder %s12, 1
      %p113 = por %p111, %p112
      %p114 = scmp.ne.s32.totalorder %s106, %s109
      %p115 = scmp.eq.s32.totalorder %s12, 0
      %p116 = por %p114, %p115
      %p117 = scmp.ne.s32.totalorder %s106, %s109
      %p118 = scmp.eq.s32.totalorder %s17, 1
      %p119 = por %p117, %p118
      %p120 = scmp.ne.s32.totalorder %s109, %s110
      %p121 = scmp.eq.s32.totalorder %s17, 0
      %p122 = por %p120, %p121
      %p123 = scmp.ne.s32.totalorder %s109, %s110
      %p124 = scmp.eq.s32.totalorder %s18, 1
      %p125 = por %p123, %p124
      %p127 = scmp.ne.s32.totalorder %s110, %s126
      %p128 = scmp.eq.s32.totalorder %s18, 0
      %p129 = por %p127, %p128
      %p130 = scmp.le.s32.totalorder 1, %s12
      %p131 = scmp.lt.s32.totalorder %s12, 3
      %p132 = pnand %p130, %p131
      %p133 = pneg %p132
      // Predicated region
      $region9: #{tpu_custom_call.1} parent=5 // pred_check
        _
      $region10: #{tpu_custom_call.1} parent=5 // pred_check_branch
        %135 = sbr.rel (%p132) target = $region12
      $region11: #{tpu_custom_call.1} parent=5 // pred_region
        %s136 = ssub.s32 %s12, 1
        // Predicated region
        $region13: #{tpu_custom_call.1} parent=11 // pred_check
          %p137 = pneg %p73
        $region14: #{tpu_custom_call.1} parent=11 // pred_check_branch
          %139 = sbr.rel (%p137) target = $region16
        $region15: #{tpu_custom_call.1} parent=11 // pred_region
          _
        $region16: #{tpu_custom_call.1} parent=11 // pred_fallthru
          _
        // Predicated region
        $region17: #{tpu_custom_call.1} parent=11 // pred_check
          %p140 = pneg %p94
        $region18: #{tpu_custom_call.1} parent=11 // pred_check_branch
          %142 = sbr.rel (%p140) target = $region20
        $region19: #{tpu_custom_call.1} parent=11 // pred_region
          _
        $region20: #{tpu_custom_call.1} parent=11 // pred_fallthru
          _
      $region12: #{tpu_custom_call.1} parent=5 // pred_fallthru
        _
      %p143 = scmp.lt.s32.totalorder %s12, 2
      // Predicated region
      $region21: #{tpu_custom_call.1} parent=5 // pred_check
        %p144 = pneg %p143
      $region22: #{tpu_custom_call.1} parent=5 // pred_check_branch
        %146 = sbr.rel (%p144) target = $region24
      $region23: #{tpu_custom_call.1} parent=5 // pred_region
        // Predicated region
        $region25: #{tpu_custom_call.1} parent=23 // pred_check
          %p147 = pneg %p46
        $region26: #{tpu_custom_call.1} parent=23 // pred_check_branch
          %149 = sbr.rel (%p147) target = $region28
        $region27: #{tpu_custom_call.1} parent=23 // pred_region
          %p150 = scmp.lt.s32.totalorder %s19, 1
          %s151 = scalar_select %p150, %s19, 1
          %p152 = scmp.lt.s32.totalorder %s20, 0
          %s153 = scalar_select %p152, %s20, 0
          %s154 = sadd.s32 %s153, %s151
          %s155 = smul.addr %s154, 8
          %s156 = scalar_lea.vmem %s0, %s155
        $region28: #{tpu_custom_call.1} parent=23 // pred_fallthru
          _
      $region24: #{tpu_custom_call.1} parent=5 // pred_fallthru
        _
      %p157 = scmp.le.s32.totalorder 1, %s12
      %p158 = scmp.lt.s32.totalorder %s12, 3
      %p159 = pnand %p157, %p158
      %p160 = pneg %p159
      // Predicated region
      $region29: #{tpu_custom_call.1} parent=5 // pred_check
        _
      $region30: #{tpu_custom_call.1} parent=5 // pred_check_branch
        %162 = sbr.rel (%p159) target = $region32
      $region31: #{tpu_custom_call.1} parent=5 // pred_region
        %s163 = ssub.s32 %s12, 1
        %p164 = scmp.lt.s32.totalorder %s21, 1
        %s165 = scalar_select %p164, %s21, 1
        %p166 = scmp.lt.s32.totalorder %s22, 0
        %s167 = scalar_select %p166, %s22, 0
        %s168 = sadd.s32 %s167, %s165
        %s169 = smul.addr %s168, 8
        %s170 = scalar_lea.vmem %s0, %s169
        %p171 = pneg %p52
        %p172 = pneg %p49
        %p173 = pneg %p73
        %p174 = pneg %p70
        %p175 = pneg %p94
        %p176 = pneg %p91
        %p177 = pneg %p122
        %p178 = pneg %p119
        %s179 = sand.u32 %s109, 1
        %s180 = scalar_lea.sflag [#allocation3], %s179
        %s181 = sand.u32 %s109, 1
        %s182 = smul.addr %s181, 8
        %s183 = scalar_lea.vmem [#allocation2], %s182
        %p184 = scmp.lt.s32.totalorder %s21, 1
        %s185 = scalar_select %p184, %s21, 1
        %p186 = scmp.lt.s32.totalorder %s22, 0
        %s187 = scalar_select %p186, %s22, 0
        %s188 = sadd.s32 %s187, %s185
        %s189 = smul.addr %s188, 8
        %s190 = scalar_lea.vmem %s0, %s189
        %v191 = vld [vmem:[%s190] sm:$0xff]
        %v192 = vld [vmem:[%s1] sm:$0xff]
        %v193 = vld [vmem:[%s1 + $0x8] sm:$0xff]
        %v194 = vld [vmem:[%s1 + $0x10] sm:$0xff]
        %v195 = vld [vmem:[%s1 + $0x18] sm:$0xff]
        %v196 = vld [vmem:[%s1 + $0x20] sm:$0xff]
        %v197 = vld [vmem:[%s1 + $0x28] sm:$0xff]
        %v198 = vld [vmem:[%s1 + $0x30] sm:$0xff]
        %v199 = vld [vmem:[%s1 + $0x38] sm:$0xff]
        %v200 = vld [vmem:[%s1 + $0x40] sm:$0xff]
        %v201 = vld [vmem:[%s1 + $0x48] sm:$0xff]
        %v202 = vld [vmem:[%s1 + $0x50] sm:$0xff]
        %v203 = vld [vmem:[%s1 + $0x58] sm:$0xff]
        %v204 = vld [vmem:[%s1 + $0x60] sm:$0xff]
        %v205 = vld [vmem:[%s1 + $0x68] sm:$0xff]
        %v206 = vld [vmem:[%s1 + $0x70] sm:$0xff]
        %v207 = vld [vmem:[%s1 + $0x78] sm:$0xff]
        %v208 = vld [vmem:[%s2] sm:$0x1]
        %v210 = vlaneseq
        %v211 = vshrl.u32 %v210, 7
        %v212 = vsub.s32 0, %v211
        %v213 = vrot.slane %v208, %v212
        %215 = vmatprep.subr.mxu0 0.0
        %216 = vmatpush1.msra.mxu0 %v192
        %217 = vmatprep.subr.mxu0 0.0
        %218 = vmatpush1.msra.mxu0 %v193
        %219 = vmatprep.subr.mxu0 0.0
        %220 = vmatpush1.msra.mxu0 %v194
        %221 = vmatprep.subr.mxu0 0.0
        %222 = vmatpush1.msra.mxu0 %v195
        %223 = vmatprep.subr.mxu0 0.0
        %224 = vmatpush1.msra.mxu0 %v196
        %225 = vmatprep.subr.mxu0 0.0
        %226 = vmatpush1.msra.mxu0 %v197
        %227 = vmatprep.subr.mxu0 0.0
        %228 = vmatpush1.msra.mxu0 %v198
        %229 = vmatprep.subr.mxu0 0.0
        %230 = vmatpush1.msra.mxu0 %v199
        %231 = vmatprep.subr.mxu0 0.0
        %232 = vmatpush1.msra.mxu0 %v200
        %233 = vmatprep.subr.mxu0 0.0
        %234 = vmatpush1.msra.mxu0 %v201
        %235 = vmatprep.subr.mxu0 0.0
        %236 = vmatpush1.msra.mxu0 %v202
        %237 = vmatprep.subr.mxu0 0.0
        %238 = vmatpush1.msra.mxu0 %v203
        %239 = vmatprep.subr.mxu0 0.0
        %240 = vmatpush1.msra.mxu0 %v204
        %241 = vmatprep.subr.mxu0 0.0
        %242 = vmatpush1.msra.mxu0 %v205
        %243 = vmatprep.subr.mxu0 0.0
        %244 = vmatpush1.msra.mxu0 %v206
        %245 = vmatprep.subr.mxu0 0.0
        %246 = vmatpush1.msra.mxu0 %v207
        %247 = vmatprep.subr.mxu0 0.0
        %248 = vmatpush1.msra.mxu0 0.0
        %249 = vmatprep.subr.mxu0 0.0
        %250 = vmatpush1.msra.mxu0 0.0
        %251 = vmatprep.subr.mxu0 0.0
        %252 = vmatpush1.msra.mxu0 0.0
        %253 = vmatprep.subr.mxu0 0.0
        %254 = vmatpush1.msra.mxu0 0.0
        %255 = vmatprep.subr.mxu0 0.0
        %256 = vmatpush1.msra.mxu0 0.0
        %257 = vmatprep.subr.mxu0 0.0
        %258 = vmatpush1.msra.mxu0 0.0
        %259 = vmatprep.subr.mxu0 0.0
        %260 = vmatpush1.msra.mxu0 0.0
        %261 = vmatprep.subr.mxu0 0.0
        %262 = vmatpush1.msra.mxu0 0.0
        %263 = vmatprep.subr.mxu0 0.0
        %264 = vmatpush1.msra.mxu0 0.0
        %265 = vmatprep.subr.mxu0 0.0
        %266 = vmatpush1.msra.mxu0 0.0
        %267 = vmatprep.subr.mxu0 0.0
        %268 = vmatpush1.msra.mxu0 0.0
        %269 = vmatprep.subr.mxu0 0.0
        %270 = vmatpush1.msra.mxu0 0.0
        %271 = vmatprep.subr.mxu0 0.0
        %272 = vmatpush1.msra.mxu0 0.0
        %273 = vmatprep.subr.mxu0 0.0
        %274 = vmatpush1.msra.mxu0 0.0
        %275 = vmatprep.subr.mxu0 0.0
        %276 = vmatpush1.msra.mxu0 0.0
        %277 = vmatprep.subr.mxu0 0.0
        %278 = vmatpush1.msra.mxu0 0.0
        %279 = vmatprep.mubr.f32.mxu0 0.0
        %280 = vmatmul.mubr.f32.gmra.mrb[0].mxu0 %v191
        %v281 = vpop.f32.mrb[0].mxu0
        %v282 = vadd.f32 %v213, %v281
        %v283 = vpop.f32.mrb[0].mxu0
        %284 = vdwg.mxu0
        %v285 = vadd.f32 %v282, 3.0
        %v286 = vmax.f32 %v285, 0.0
        %v287 = vmin.f32 %v286, 6.0
        %v288 = vmul.f32 %v282, %v287
        %v289 = vmul.f32 %v288, 0.16666667
        %vm290 = vcmask 523264
        %291 = vst.msk [vmem:[%s183] sm:$0xff] %vm290, %v289
        %s292 = sand.u32 %s109, 1
        %s293 = scalar_lea.sflag [#allocation3], %s292
        %s294 = sand.u32 %s109, 1
        %s295 = smul.addr %s294, 8
        %s296 = scalar_lea.vmem [#allocation2], %s295
        // Predicated region
        $region33: #{tpu_custom_call.1} parent=31 // pred_check
          %p297 = pneg %p119
        $region34: #{tpu_custom_call.1} parent=31 // pred_check_branch
          %299 = sbr.rel (%p297) target = $region36
        $region35: #{tpu_custom_call.1} parent=31 // pred_region
          %s301 = ssub.s32 128, 128
          %302 = vsyncadd %s293, %s301
          %s303 = sadd.s32 %s22, %s21
          %s304 = smul.addr %s303, 128
          %s305 = scalar_lea.hbm %s3, %s304
          %s307 = sshll.u32 %s296, 4
          %s308 = int_to_ptr.vmem [resolvable:$true] %s307
          %310 = dma.vmem_to_hbm [thread:$0]  %s308, 128, %s305, %s293
        $region36: #{tpu_custom_call.1} parent=31 // pred_fallthru
          _
      $region32: #{tpu_custom_call.1} parent=5 // pred_fallthru
        _
      %p311 = scmp.le.s32.totalorder 2, %s12
      // Predicated region
      $region37: #{tpu_custom_call.1} parent=5 // pred_check
        %p312 = pneg %p311
      $region38: #{tpu_custom_call.1} parent=5 // pred_check_branch
        %314 = sbr.rel (%p312) target = $region40
      $region39: #{tpu_custom_call.1} parent=5 // pred_region
        %s315 = ssub.s32 %s12, 2
        // Predicated region
        $region41: #{tpu_custom_call.1} parent=39 // pred_check
          %p316 = pneg %p125
        $region42: #{tpu_custom_call.1} parent=39 // pred_check_branch
          %318 = sbr.rel (%p316) target = $region44
        $region43: #{tpu_custom_call.1} parent=39 // pred_region
          %s319 = sand.u32 %s110, 1
          %s320 = scalar_lea.sflag [#allocation3], %s319
          %s321 = sand.u32 %s110, 1
          %s322 = smul.addr %s321, 8
          %s323 = scalar_lea.vmem [#allocation2], %s322
          %324 = dma.done %s320, 128
        $region44: #{tpu_custom_call.1} parent=39 // pred_fallthru
          _
      $region40: #{tpu_custom_call.1} parent=5 // pred_fallthru
        _
    $region6: #{tpu_custom_call.1} parent=1 // loop_footer
      %s16 = sadd.s32 1, %s12
    $region7: #{tpu_custom_call.1} parent=1 // loop_footer_branch
      %11 = sbr.rel target = $region3
    $region8: #{tpu_custom_call.1} parent=1 // loop_exit
      _
    %325 = vsyncpa [#allocation3], 1
    %s326 = scalar_lea.sflag [#allocation3], 1
    %327 = vsyncpa %s326, 1

</llo_original>
